<compile_context>
chip_gen: v6e
topology: v6e:2x2x1
jax: 0.10.0
libtpu: 0.0.40
codegen_flags: <defaults>
</compile_context>

<pallas_src>
import functools

import jax
import jax.numpy as jnp
from jax.experimental import pallas as pl
from jax.experimental.pallas import tpu as pltpu


def _disc2_kernel(bias_ref, c_ref, h_pl_ref, h_mi_ref, w_ref, sc1_ref, sc2_ref):
    """One TM-row tile of the bilinear scores, lane-dense output."""
    # Tiny, VMEM-resident weight; match the activation dtype so the MXU runs
    # bf16 x bf16 when the inputs are bf16 (f32 otherwise).
    w = w_ref[...].astype(c_ref.dtype)                       # (ft, n_h)

    # Shared projection u[m, i] = sum_j c[m, j] * W[i, j]  -> (TM, ft).
    # Contracting n_h of both operands avoids materializing W^T.
    u = jax.lax.dot_general(
        c_ref[...], w,
        dimension_numbers=(((1,), (1,)), ((), ())),
        preferred_element_type=jnp.float32)                  # (TM, ft), f32 acc

    bias = bias_ref[0]                                       # scalar (SMEM prefetch)
    ft = u.shape[-1]
    ones_row = jnp.ones((1, ft), dtype=jnp.float32)
    # Contract ft of both operands -> (1, TM): the per-row reduction and the
    # (TM,1)->(1,TM) relayout happen in one small MXU op, keeping the output
    # store lane-dense (full-vreg, unmasked).
    dn = (((1,), (1,)), ((), ()))

    # positive samples
    p1 = h_pl_ref[...].astype(jnp.float32) * u               # (TM, ft), VPU
    s1 = jax.lax.dot_general(ones_row, p1, dimension_numbers=dn,
                             preferred_element_type=jnp.float32)   # (1, TM)
    sc1_ref[...] = (s1 + bias).reshape(sc1_ref.shape)              # (1, 1, TM)

    # negative (corrupted) samples — reuse u, no second big matmul.
    p2 = h_mi_ref[...].astype(jnp.float32) * u
    s2 = jax.lax.dot_general(ones_row, p2, dimension_numbers=dn,
                             preferred_element_type=jnp.float32)
    sc2_ref[...] = (s2 + bias).reshape(sc2_ref.shape)


def _round_up(x, m):
    return ((x + m - 1) // m) * m


@functools.partial(jax.jit, static_argnames=("block_rows",))
def discriminator2_forward(c, h_pl, h_mi, weight, bias,
                           s_bias1=None, s_bias2=None, *, block_rows=2048):
    """JAX wrapper reproducing Discriminator2.forward.

    c     : (B, N, n_h)
    h_pl  : (B, N, ft_size)
    h_mi  : (B, N, ft_size)
    weight: (1, ft_size, n_h)   (nn.Bilinear weight)
    bias  : (1,)                (nn.Bilinear bias)
    returns logits: (B, 2N) float32
    """
    B, N, ft_size = h_pl.shape
    n_h = c.shape[-1]
    M = B * N

    # Row tile: multiple of 128 (lane-dense output), capped by block_rows.
    # Sized against v7x's smaller VMEM: per double-buffered set this is only
    # ~2 * TM * (2*ft + n_h) * itemsize bytes, far under the 32 MiB scoped limit.
    TM = min(block_rows, _round_up(M, 128))
    M_pad = pl.cdiv(M, TM) * TM
    G = M_pad // TM

    # Keep native dtype (no wrapper-side f32 materialization pass over HBM).
    h_pl_2d = h_pl.reshape(M, ft_size)
    h_mi_2d = h_mi.reshape(M, ft_size)
    c_2d = c.reshape(M, n_h)
    if M_pad != M:
        pad = M_pad - M
        h_pl_2d = jnp.pad(h_pl_2d, ((0, pad), (0, 0)))
        h_mi_2d = jnp.pad(h_mi_2d, ((0, pad), (0, 0)))
        c_2d = jnp.pad(c_2d, ((0, pad), (0, 0)))

    w_2d = weight.reshape(ft_size, n_h)
    b_1d = jnp.asarray(bias, jnp.float32).reshape(1)

    sc1_t, sc2_t = pl.pallas_call(
        _disc2_kernel,
        out_shape=(
            jax.ShapeDtypeStruct((G, 1, TM), jnp.float32),
            jax.ShapeDtypeStruct((G, 1, TM), jnp.float32),
        ),
        grid_spec=pltpu.PrefetchScalarGridSpec(
            num_scalar_prefetch=1,          # bias scalar -> SMEM
            grid=(G,),
            in_specs=[
                pl.BlockSpec((TM, n_h),      lambda i, b: (i, 0)),   # c tile
                pl.BlockSpec((TM, ft_size),  lambda i, b: (i, 0)),   # h_pl tile
                pl.BlockSpec((TM, ft_size),  lambda i, b: (i, 0)),   # h_mi tile
                pl.BlockSpec((ft_size, n_h), lambda i, b: (0, 0)),   # W, resident
            ],
            out_specs=[
                pl.BlockSpec((1, 1, TM), lambda i, b: (i, 0, 0)),    # sc1 lane-dense
                pl.BlockSpec((1, 1, TM), lambda i, b: (i, 0, 0)),    # sc2 lane-dense
            ],
        ),
        compiler_params=pltpu.CompilerParams(
            dimension_semantics=("parallel",)),   # shard M across v7x's 2 TCs
    )(b_1d, c_2d, h_pl_2d, h_mi_2d, w_2d)

    sc_1 = sc1_t.reshape(M_pad)[:M].reshape(B, N)
    sc_2 = sc2_t.reshape(M_pad)[:M].reshape(B, N)
    if s_bias1 is not None:
        sc_1 = sc_1 + s_bias1
    if s_bias2 is not None:
        sc_2 = sc_2 + s_bias2
    return jnp.concatenate((sc_1, sc_2), axis=1)


def _xavier_uniform_bilinear(key, out_f, in1, in2):
    # torch xavier_uniform_ on weight of shape (out_f, in1, in2):
    # fan_in = in1 * in2, fan_out = out_f * in2
    fan_in = in1 * in2
    fan_out = out_f * in2
    bound = float(jnp.sqrt(6.0 / (fan_in + fan_out)))
    return jax.random.uniform(key, (out_f, in1, in2),
                              minval=-bound, maxval=bound, dtype=jnp.float32)


if __name__ == "__main__":
    key = jax.random.PRNGKey(0)
    k_w, k_c, k_pl, k_mi = jax.random.split(key, 4)

    B, N = 2, 8
    ft_size, n_h = 32, 16

    weight = _xavier_uniform_bilinear(k_w, 1, ft_size, n_h)   # (1, ft_size, n_h)
    bias = jnp.zeros((1,), dtype=jnp.float32)                 # filled with 0.0

    c = jax.random.normal(k_c, (B, N, n_h), dtype=jnp.float32)
    h_pl = jax.random.normal(k_pl, (B, N, ft_size), dtype=jnp.float32)
    h_mi = jax.random.normal(k_mi, (B, N, ft_size), dtype=jnp.float32)

    logits = discriminator2_forward(c, h_pl, h_mi, weight, bias)
    logits = jax.block_until_ready(logits)

    # Pure-JAX reference check of the bilinear form.
    ref1 = jnp.einsum("bni,ij,bnj->bn", h_pl, weight[0], c) + bias[0]
    ref2 = jnp.einsum("bni,ij,bnj->bn", h_mi, weight[0], c) + bias[0]
    ref = jnp.concatenate((ref1, ref2), axis=1)
    assert logits.shape == (B, 2 * N)
    assert jnp.allclose(logits, ref, atol=1e-4, rtol=1e-4)

    print("KERNEL_OK")
</pallas_src>

<mosaic_0001>
module attributes {stable_mosaic.version = 11 : i64} {
  func.func @_disc2_kernel(%arg0: i32, %arg1: memref<1xf32, #tpu.memory_space<smem>>, %arg2: memref<128x16xf32, #tpu.memory_space<vmem>>, %arg3: memref<128x32xf32, #tpu.memory_space<vmem>>, %arg4: memref<128x32xf32, #tpu.memory_space<vmem>>, %arg5: memref<32x16xf32, #tpu.memory_space<vmem>>, %arg6: memref<1x1x128xf32, #tpu.memory_space<vmem>>, %arg7: memref<1x1x128xf32, #tpu.memory_space<vmem>>) attributes {dimension_semantics = [#tpu.dimension_semantics<parallel>], iteration_bounds = array<i64: 1>, scalar_prefetch = 1 : i64, scratch_operands = 0 : i64, tpu.core_type = #tpu.core_type<tc>, window_params = [{transform_indices = @transform_0, window_bounds = array<i64: 128, 16>}, {transform_indices = @transform_1, window_bounds = array<i64: 128, 32>}, {transform_indices = @transform_2, window_bounds = array<i64: 128, 32>}, {pipeline_mode = #tpu.pipeline_mode<synchronous>, transform_indices = @transform_3, window_bounds = array<i64: 32, 16>}, {transform_indices = @transform_4, window_bounds = array<i64: 1, 1, 128>}, {transform_indices = @transform_5, window_bounds = array<i64: 1, 1, 128>}]} {
    %c0 = arith.constant 0 : index
    %c0_0 = arith.constant 0 : index
    %0 = vector.load %arg5[%c0, %c0_0] : memref<32x16xf32, #tpu.memory_space<vmem>>, vector<32x16xf32>
    %c0_1 = arith.constant 0 : index
    %c0_2 = arith.constant 0 : index
    %1 = vector.load %arg2[%c0_1, %c0_2] : memref<128x16xf32, #tpu.memory_space<vmem>>, vector<128x16xf32>
    %cst = arith.constant dense<0.000000e+00> : vector<128x32xf32>
    %2 = tpu.matmul %1, %0, %cst {dimension_numbers = #tpu.dot_dimension_numbers<[1], [1], [0], [0], [0, 0, 1, 0], [], []>} : vector<128x16xf32>, vector<32x16xf32>, vector<128x32xf32> -> vector<128x32xf32>
    %c0_3 = arith.constant 0 : index
    %3 = memref.load %arg1[%c0_3] : memref<1xf32, #tpu.memory_space<smem>>
    %cst_4 = arith.constant 1.000000e+00 : f32
    %4 = vector.broadcast %cst_4 : f32 to vector<1x32xf32>
    %c0_5 = arith.constant 0 : index
    %c0_6 = arith.constant 0 : index
    %5 = vector.load %arg3[%c0_5, %c0_6] : memref<128x32xf32, #tpu.memory_space<vmem>>, vector<128x32xf32>
    %6 = arith.mulf %5, %2 : vector<128x32xf32>
    %cst_7 = arith.constant dense<0.000000e+00> : vector<1x128xf32>
    %7 = tpu.matmul %4, %6, %cst_7 {dimension_numbers = #tpu.dot_dimension_numbers<[1], [1], [0], [0], [0, 0, 1, 0], [], []>} : vector<1x32xf32>, vector<128x32xf32>, vector<1x128xf32> -> vector<1x128xf32>
    %8 = vector.broadcast %3 : f32 to vector<1x128xf32>
    %9 = arith.addf %7, %8 : vector<1x128xf32>
    %10 = vector.shape_cast %9 : vector<1x128xf32> to vector<1x1x128xf32>
    %c0_8 = arith.constant 0 : index
    %c0_9 = arith.constant 0 : index
    %c0_10 = arith.constant 0 : index
    %11 = vector.load %arg6[%c0_8, %c0_9, %c0_10] : memref<1x1x128xf32, #tpu.memory_space<vmem>>, vector<1x1x128xf32>
    tpu.vector_store %arg6[%c0_8, %c0_9, %c0_10], %10 {strides = array<i32>} : memref<1x1x128xf32, #tpu.memory_space<vmem>>, vector<1x1x128xf32>,
    %c0_11 = arith.constant 0 : index
    %c0_12 = arith.constant 0 : index
    %12 = vector.load %arg4[%c0_11, %c0_12] : memref<128x32xf32, #tpu.memory_space<vmem>>, vector<128x32xf32>
    %13 = arith.mulf %12, %2 : vector<128x32xf32>
    %cst_13 = arith.constant dense<0.000000e+00> : vector<1x128xf32>
    %14 = tpu.matmul %4, %13, %cst_13 {dimension_numbers = #tpu.dot_dimension_numbers<[1], [1], [0], [0], [0, 0, 1, 0], [], []>} : vector<1x32xf32>, vector<128x32xf32>, vector<1x128xf32> -> vector<1x128xf32>
    %15 = vector.broadcast %3 : f32 to vector<1x128xf32>
    %16 = arith.addf %14, %15 : vector<1x128xf32>
    %17 = vector.shape_cast %16 : vector<1x128xf32> to vector<1x1x128xf32>
    %c0_14 = arith.constant 0 : index
    %c0_15 = arith.constant 0 : index
    %c0_16 = arith.constant 0 : index
    %18 = vector.load %arg7[%c0_14, %c0_15, %c0_16] : memref<1x1x128xf32, #tpu.memory_space<vmem>>, vector<1x1x128xf32>
    tpu.vector_store %arg7[%c0_14, %c0_15, %c0_16], %17 {strides = array<i32>} : memref<1x1x128xf32, #tpu.memory_space<vmem>>, vector<1x1x128xf32>,
    return
  }
  func.func @transform_0(%arg0: i32, %arg1: memref<1xf32, #tpu.memory_space<smem>>) -> (i32, i32) {
    %c0_i32 = arith.constant 0 : i32
    %c0_i32_0 = arith.constant 0 : i32
    return %arg0, %c0_i32 : i32, i32
  }
  func.func @transform_1(%arg0: i32, %arg1: memref<1xf32, #tpu.memory_space<smem>>) -> (i32, i32) {
    %c0_i32 = arith.constant 0 : i32
    %c0_i32_0 = arith.constant 0 : i32
    return %arg0, %c0_i32 : i32, i32
  }
  func.func @transform_2(%arg0: i32, %arg1: memref<1xf32, #tpu.memory_space<smem>>) -> (i32, i32) {
    %c0_i32 = arith.constant 0 : i32
    %c0_i32_0 = arith.constant 0 : i32
    return %arg0, %c0_i32 : i32, i32
  }
  func.func @transform_3(%arg0: i32, %arg1: memref<1xf32, #tpu.memory_space<smem>>) -> (i32, i32) {
    %c0_i32 = arith.constant 0 : i32
    %c0_i32_0 = arith.constant 0 : i32
    %c0_i32_1 = arith.constant 0 : i32
    return %c0_i32, %c0_i32_0 : i32, i32
  }
  func.func @transform_4(%arg0: i32, %arg1: memref<1xf32, #tpu.memory_space<smem>>) -> (i32, i32, i32) {
    %c0_i32 = arith.constant 0 : i32
    %c0_i32_0 = arith.constant 0 : i32
    %c0_i32_1 = arith.constant 0 : i32
    return %arg0, %c0_i32, %c0_i32_0 : i32, i32, i32
  }
  func.func @transform_5(%arg0: i32, %arg1: memref<1xf32, #tpu.memory_space<smem>>) -> (i32, i32, i32) {
    %c0_i32 = arith.constant 0 : i32
    %c0_i32_0 = arith.constant 0 : i32
    %c0_i32_1 = arith.constant 0 : i32
    return %arg0, %c0_i32, %c0_i32_0 : i32, i32, i32
  }
}

</mosaic_0001>

<llo_original>
// kernel: discriminator2_forward.1
$region0: #{discriminator2_forward.1}
  #allocation0 [shape = 'u32[]', space=smem, size = 0x4, offset = 0x4, fixed_abs, tag = 'smem constant byte address 0x4 - core index']
  #allocation1 [shape = 'u32[144,128]{1,0:T(1,128)}', space=vmem, size = 0x12000, scoped, tag = 'internal scratch']
  #allocation2 [shape = 's32[1]{0}', space=sflag, size = 0x4, scoped, tag = 'scoped memory for discriminator2_forward.1']
  #allocation3 [shape = 'f32[1]{0:T(128)S(6)}', space=smem, size = 0x200, scoped, tag = 'prefetched SMEM operand 0']
  %s0 = inlined_call_operand.<no memory space> [shape: f32[1], index: 0, kind: input, shape index: {}]
  %s1 = inlined_call_operand.vmem [shape: f32[128,16], index: 1, kind: input, shape index: {}]
  %s2 = inlined_call_operand.vmem [shape: f32[128,32], index: 2, kind: input, shape index: {}]
  %s3 = inlined_call_operand.vmem [shape: f32[128,32], index: 3, kind: input, shape index: {}]
  %s4 = inlined_call_operand.vmem [shape: f32[32,16], index: 4, kind: input, shape index: {}]
  %s5 = inlined_call_operand.vmem [shape: f32[1,1,128], index: 5, kind: output, shape index: {0}]
  %s6 = inlined_call_operand.vmem [shape: f32[1,1,128], index: 6, kind: output, shape index: {1}]
  %7 = xla_tuple %s5, %s6
  %s8 = sld [smem:[#allocation0]]
  $region34: #{discriminator2_forward.1} parent=0
    _
  %s10 = ssub.s32 1, %s8
  %s11 = scalar_select 0, %s10, %s8
  %12 = sst [smem:[#allocation3]] %s0
  // Predicated region
  $region2: #{discriminator2_forward.1} parent=0 // pred_check
    _
  $region3: #{discriminator2_forward.1} parent=0 // pred_check_branch
    %14 = sbr.rel (0) target = $region5
  $region4: #{discriminator2_forward.1} parent=0 // pred_region
    _
  $region5: #{discriminator2_forward.1} parent=0 // pred_fallthru
    _
  // Predicated region
  $region6: #{discriminator2_forward.1} parent=0 // pred_check
    _
  $region7: #{discriminator2_forward.1} parent=0 // pred_check_branch
    %16 = sbr.rel (0) target = $region9
  $region8: #{discriminator2_forward.1} parent=0 // pred_region
    _
  $region9: #{discriminator2_forward.1} parent=0 // pred_fallthru
    _
  // Predicated region
  $region10: #{discriminator2_forward.1} parent=0 // pred_check
    _
  $region11: #{discriminator2_forward.1} parent=0 // pred_check_branch
    %18 = sbr.rel (0) target = $region13
  $region12: #{discriminator2_forward.1} parent=0 // pred_region
    _
  $region13: #{discriminator2_forward.1} parent=0 // pred_fallthru
    _
  // Predicated region
  $region14: #{discriminator2_forward.1} parent=0 // pred_check
    _
  $region15: #{discriminator2_forward.1} parent=0 // pred_check_branch
    %20 = sbr.rel (0) target = $region17
  $region16: #{discriminator2_forward.1} parent=0 // pred_region
    _
  $region17: #{discriminator2_forward.1} parent=0 // pred_fallthru
    _
  %v21 = vld [vmem:[%s4] sm:$0xff]
  %v22 = vld [vmem:[%s4 + $0x8] sm:$0xff]
  %v23 = vld [vmem:[%s4 + $0x10] sm:$0xff]
  %v24 = vld [vmem:[%s4 + $0x18] sm:$0xff]
  %v25 = vld [vmem:[%s1] sm:$0xff]
  %v26 = vld [vmem:[%s1 + $0x8] sm:$0xff]
  %v27 = vld [vmem:[%s1 + $0x10] sm:$0xff]
  %v28 = vld [vmem:[%s1 + $0x18] sm:$0xff]
  %v29 = vld [vmem:[%s1 + $0x20] sm:$0xff]
  %v30 = vld [vmem:[%s1 + $0x28] sm:$0xff]
  %v31 = vld [vmem:[%s1 + $0x30] sm:$0xff]
  %v32 = vld [vmem:[%s1 + $0x38] sm:$0xff]
  %v33 = vld [vmem:[%s1 + $0x40] sm:$0xff]
  %v34 = vld [vmem:[%s1 + $0x48] sm:$0xff]
  %v35 = vld [vmem:[%s1 + $0x50] sm:$0xff]
  %v36 = vld [vmem:[%s1 + $0x58] sm:$0xff]
  %v37 = vld [vmem:[%s1 + $0x60] sm:$0xff]
  %v38 = vld [vmem:[%s1 + $0x68] sm:$0xff]
  %v39 = vld [vmem:[%s1 + $0x70] sm:$0xff]
  %v40 = vld [vmem:[%s1 + $0x78] sm:$0xff]
  %vm41 = vcmask 130048
  %v43 = vsel %vm41, %v25, 0
  %v46 = vsel %vm41, %v26, 0
  %v49 = vsel %vm41, %v27, 0
  %v52 = vsel %vm41, %v28, 0
  %v55 = vsel %vm41, %v29, 0
  %v58 = vsel %vm41, %v30, 0
  %v61 = vsel %vm41, %v31, 0
  %v64 = vsel %vm41, %v32, 0
  %v67 = vsel %vm41, %v33, 0
  %v70 = vsel %vm41, %v34, 0
  %v73 = vsel %vm41, %v35, 0
  %v76 = vsel %vm41, %v36, 0
  %v79 = vsel %vm41, %v37, 0
  %v82 = vsel %vm41, %v38, 0
  %v85 = vsel %vm41, %v39, 0
  %v88 = vsel %vm41, %v40, 0
  %v91 = vsel %vm41, %v21, 0
  %v94 = vsel %vm41, %v22, 0
  %v97 = vsel %vm41, %v23, 0
  %v100 = vsel %vm41, %v24, 0
  %102 = vmatprep.subr.mxu0 0.0
  %103 = vmatpush1.xpose.msra.mxu0 0.0
  %104 = vmatprep.subr.mxu0 0.0
  %105 = vmatpush1.xpose.msra.mxu0 0.0
  %106 = vmatprep.subr.mxu0 0.0
  %107 = vmatpush1.xpose.msra.mxu0 0.0
  %108 = vmatprep.subr.mxu0 0.0
  %109 = vmatpush1.xpose.msra.mxu0 0.0
  %110 = vmatprep.subr.mxu0 0.0
  %111 = vmatpush1.xpose.msra.mxu0 0.0
  %112 = vmatprep.subr.mxu0 0.0
  %113 = vmatpush1.xpose.msra.mxu0 0.0
  %114 = vmatprep.subr.mxu0 0.0
  %115 = vmatpush1.xpose.msra.mxu0 0.0
  %116 = vmatprep.subr.mxu0 0.0
  %117 = vmatpush1.xpose.msra.mxu0 0.0
  %118 = vmatprep.subr.mxu0 0.0
  %119 = vmatpush1.xpose.msra.mxu0 0.0
  %120 = vmatprep.subr.mxu0 0.0
  %121 = vmatpush1.xpose.msra.mxu0 0.0
  %122 = vmatprep.subr.mxu0 0.0
  %123 = vmatpush1.xpose.msra.mxu0 0.0
  %124 = vmatprep.subr.mxu0 0.0
  %125 = vmatpush1.xpose.msra.mxu0 0.0
  %126 = vmatprep.subr.mxu0 0.0
  %127 = vmatpush1.xpose.msra.mxu0 %v100
  %128 = vmatprep.subr.mxu0 0.0
  %129 = vmatpush1.xpose.msra.mxu0 %v97
  %130 = vmatprep.subr.mxu0 0.0
  %131 = vmatpush1.xpose.msra.mxu0 %v94
  %132 = vmatprep.subr.mxu0 0.0
  %133 = vmatpush1.xpose.msra.mxu0 %v91
  %134 = vmatprep.subr.mxu0 0.0
  %135 = vmatpush2.xpose.msra.mxu0 0.0
  %136 = vmatprep.subr.mxu0 0.0
  %137 = vmatpush2.xpose.msra.mxu0 0.0
  %138 = vmatprep.subr.mxu0 0.0
  %139 = vmatpush2.xpose.msra.mxu0 0.0
  %140 = vmatprep.subr.mxu0 0.0
  %141 = vmatpush2.xpose.msra.mxu0 0.0
  %142 = vmatprep.subr.mxu0 0.0
  %143 = vmatpush2.xpose.msra.mxu0 0.0
  %144 = vmatprep.subr.mxu0 0.0
  %145 = vmatpush2.xpose.msra.mxu0 0.0
  %146 = vmatprep.subr.mxu0 0.0
  %147 = vmatpush2.xpose.msra.mxu0 0.0
  %148 = vmatprep.subr.mxu0 0.0
  %149 = vmatpush2.xpose.msra.mxu0 0.0
  %150 = vmatprep.subr.mxu0 0.0
  %151 = vmatpush2.xpose.msra.mxu0 0.0
  %152 = vmatprep.subr.mxu0 0.0
  %153 = vmatpush2.xpose.msra.mxu0 0.0
  %154 = vmatprep.subr.mxu0 0.0
  %155 = vmatpush2.xpose.msra.mxu0 0.0
  %156 = vmatprep.subr.mxu0 0.0
  %157 = vmatpush2.xpose.msra.mxu0 0.0
  %158 = vmatprep.subr.mxu0 0.0
  %159 = vmatpush2.xpose.msra.mxu0 0.0
  %160 = vmatprep.subr.mxu0 0.0
  %161 = vmatpush2.xpose.msra.mxu0 0.0
  %162 = vmatprep.subr.mxu0 0.0
  %163 = vmatpush2.xpose.msra.mxu0 0.0
  %164 = vmatprep.subr.mxu0 0.0
  %165 = vmatpush2.xpose.msra.mxu0 0.0
  %166 = vmatprep.mubr.f32.mxu0 0.0
  %167 = vmatmul.mubr.f32.gmra.mxu0 %v43
  %v168 = vpop.f32.mrf.mxu0
  %v169 = vadd.f32 0.0, %v168
  %v170 = vpop.f32.mrf.mxu0
  %171 = vmatprep.mubr.f32.mxu0 0.0
  %172 = vmatmul.mubr.f32.gmra.mxu0 %v46
  %v173 = vpop.f32.mrf.mxu0
  %v174 = vadd.f32 0.0, %v173
  %v175 = vpop.f32.mrf.mxu0
  %176 = vmatprep.mubr.f32.mxu0 0.0
  %177 = vmatmul.mubr.f32.gmra.mxu0 %v49
  %v178 = vpop.f32.mrf.mxu0
  %v179 = vadd.f32 0.0, %v178
  %v180 = vpop.f32.mrf.mxu0
  %181 = vmatprep.mubr.f32.mxu0 0.0
  %182 = vmatmul.mubr.f32.gmra.mxu0 %v52
  %v183 = vpop.f32.mrf.mxu0
  %v184 = vadd.f32 0.0, %v183
  %v185 = vpop.f32.mrf.mxu0
  %186 = vmatprep.mubr.f32.mxu0 0.0
  %187 = vmatmul.mubr.f32.gmra.mxu0 %v55
  %v188 = vpop.f32.mrf.mxu0
  %v189 = vadd.f32 0.0, %v188
  %v190 = vpop.f32.mrf.mxu0
  %191 = vmatprep.mubr.f32.mxu0 0.0
  %192 = vmatmul.mubr.f32.gmra.mxu0 %v58
  %v193 = vpop.f32.mrf.mxu0
  %v194 = vadd.f32 0.0, %v193
  %v195 = vpop.f32.mrf.mxu0
  %196 = vmatprep.mubr.f32.mxu0 0.0
  %197 = vmatmul.mubr.f32.gmra.mxu0 %v61
  %v198 = vpop.f32.mrf.mxu0
  %v199 = vadd.f32 0.0, %v198
  %v200 = vpop.f32.mrf.mxu0
  %201 = vmatprep.mubr.f32.mxu0 0.0
  %202 = vmatmul.mubr.f32.gmra.mxu0 %v64
  %v203 = vpop.f32.mrf.mxu0
  %v204 = vadd.f32 0.0, %v203
  %v205 = vpop.f32.mrf.mxu0
  %206 = vmatprep.mubr.f32.mxu0 0.0
  %207 = vmatmul.mubr.f32.gmra.mxu0 %v67
  %v208 = vpop.f32.mrf.mxu0
  %v209 = vadd.f32 0.0, %v208
  %v210 = vpop.f32.mrf.mxu0
  %211 = vmatprep.mubr.f32.mxu0 0.0
  %212 = vmatmul.mubr.f32.gmra.mxu0 %v70
  %v213 = vpop.f32.mrf.mxu0
  %v214 = vadd.f32 0.0, %v213
  %v215 = vpop.f32.mrf.mxu0
  %216 = vmatprep.mubr.f32.mxu0 0.0
  %217 = vmatmul.mubr.f32.gmra.mxu0 %v73
  %v218 = vpop.f32.mrf.mxu0
  %v219 = vadd.f32 0.0, %v218
  %v220 = vpop.f32.mrf.mxu0
  %221 = vmatprep.mubr.f32.mxu0 0.0
  %222 = vmatmul.mubr.f32.gmra.mxu0 %v76
  %v223 = vpop.f32.mrf.mxu0
  %v224 = vadd.f32 0.0, %v223
  %v225 = vpop.f32.mrf.mxu0
  %226 = vmatprep.mubr.f32.mxu0 0.0
  %227 = vmatmul.mubr.f32.gmra.mxu0 %v79
  %v228 = vpop.f32.mrf.mxu0
  %v229 = vadd.f32 0.0, %v228
  %v230 = vpop.f32.mrf.mxu0
  %231 = vmatprep.mubr.f32.mxu0 0.0
  %232 = vmatmul.mubr.f32.gmra.mxu0 %v82
  %v233 = vpop.f32.mrf.mxu0
  %v234 = vadd.f32 0.0, %v233
  %v235 = vpop.f32.mrf.mxu0
  %236 = vmatprep.mubr.f32.mxu0 0.0
  %237 = vmatmul.mubr.f32.gmra.mxu0 %v85
  %v238 = vpop.f32.mrf.mxu0
  %v239 = vadd.f32 0.0, %v238
  %v240 = vpop.f32.mrf.mxu0
  %241 = vmatprep.mubr.f32.mxu0 0.0
  %242 = vmatmul.mubr.f32.gmra.mxu0 %v88
  %v243 = vpop.f32.mrf.mxu0
  %v244 = vadd.f32 0.0, %v243
  %v245 = vpop.f32.mrf.mxu0
  %246 = vdwg.mxu0
  %s247 = sld [smem:[#allocation3]]
  %v248 = vld [vmem:[%s2] sm:$0xff]
  %v249 = vld [vmem:[%s2 + $0x8] sm:$0xff]
  %v250 = vld [vmem:[%s2 + $0x10] sm:$0xff]
  %v251 = vld [vmem:[%s2 + $0x18] sm:$0xff]
  %v252 = vld [vmem:[%s2 + $0x20] sm:$0xff]
  %v253 = vld [vmem:[%s2 + $0x28] sm:$0xff]
  %v254 = vld [vmem:[%s2 + $0x30] sm:$0xff]
  %v255 = vld [vmem:[%s2 + $0x38] sm:$0xff]
  %v256 = vld [vmem:[%s2 + $0x40] sm:$0xff]
  %v257 = vld [vmem:[%s2 + $0x48] sm:$0xff]
  %v258 = vld [vmem:[%s2 + $0x50] sm:$0xff]
  %v259 = vld [vmem:[%s2 + $0x58] sm:$0xff]
  %v260 = vld [vmem:[%s2 + $0x60] sm:$0xff]
  %v261 = vld [vmem:[%s2 + $0x68] sm:$0xff]
  %v262 = vld [vmem:[%s2 + $0x70] sm:$0xff]
  %v263 = vld [vmem:[%s2 + $0x78] sm:$0xff]
  %v264 = vmul.f32 %v248, %v169
  %v265 = vmul.f32 %v249, %v174
  %v266 = vmul.f32 %v250, %v179
  %v267 = vmul.f32 %v251, %v184
  %v268 = vmul.f32 %v252, %v189
  %v269 = vmul.f32 %v253, %v194
  %v270 = vmul.f32 %v254, %v199
  %v271 = vmul.f32 %v255, %v204
  %v272 = vmul.f32 %v256, %v209
  %v273 = vmul.f32 %v257, %v214
  %v274 = vmul.f32 %v258, %v219
  %v275 = vmul.f32 %v259, %v224
  %v276 = vmul.f32 %v260, %v229
  %v277 = vmul.f32 %v261, %v234
  %v278 = vmul.f32 %v262, %v239
  %v279 = vmul.f32 %v263, %v244
  %v280 = vstv %s247
  %vm281 = vcmask 261120
  %v283 = vsel %vm281, 1.0, 0
  %v286 = vsel %vm281, %v264, 0
  %v289 = vsel %vm281, %v265, 0
  %v292 = vsel %vm281, %v266, 0
  %v295 = vsel %vm281, %v267, 0
  %v298 = vsel %vm281, %v268, 0
  %v301 = vsel %vm281, %v269, 0
  %v304 = vsel %vm281, %v270, 0
  %v307 = vsel %vm281, %v271, 0
  %v310 = vsel %vm281, %v272, 0
  %v313 = vsel %vm281, %v273, 0
  %v316 = vsel %vm281, %v274, 0
  %v319 = vsel %vm281, %v275, 0
  %v322 = vsel %vm281, %v276, 0
  %v325 = vsel %vm281, %v277, 0
  %v328 = vsel %vm281, %v278, 0
  %v331 = vsel %vm281, %v279, 0
  %333 = vmatprep.subr.mxu0 0.0
  %334 = vmatpush1.xpose.msra.mxu0 %v331
  %335 = vmatprep.subr.mxu0 0.0
  %336 = vmatpush1.xpose.msra.mxu0 %v328
  %337 = vmatprep.subr.mxu0 0.0
  %338 = vmatpush1.xpose.msra.mxu0 %v325
  %339 = vmatprep.subr.mxu0 0.0
  %340 = vmatpush1.xpose.msra.mxu0 %v322
  %341 = vmatprep.subr.mxu0 0.0
  %342 = vmatpush1.xpose.msra.mxu0 %v319
  %343 = vmatprep.subr.mxu0 0.0
  %344 = vmatpush1.xpose.msra.mxu0 %v316
  %345 = vmatprep.subr.mxu0 0.0
  %346 = vmatpush1.xpose.msra.mxu0 %v313
  %347 = vmatprep.subr.mxu0 0.0
  %348 = vmatpush1.xpose.msra.mxu0 %v310
  %349 = vmatprep.subr.mxu0 0.0
  %350 = vmatpush1.xpose.msra.mxu0 %v307
  %351 = vmatprep.subr.mxu0 0.0
  %352 = vmatpush1.xpose.msra.mxu0 %v304
  %353 = vmatprep.subr.mxu0 0.0
  %354 = vmatpush1.xpose.msra.mxu0 %v301
  %355 = vmatprep.subr.mxu0 0.0
  %356 = vmatpush1.xpose.msra.mxu0 %v298
  %357 = vmatprep.subr.mxu0 0.0
  %358 = vmatpush1.xpose.msra.mxu0 %v295
  %359 = vmatprep.subr.mxu0 0.0
  %360 = vmatpush1.xpose.msra.mxu0 %v292
  %361 = vmatprep.subr.mxu0 0.0
  %362 = vmatpush1.xpose.msra.mxu0 %v289
  %363 = vmatprep.subr.mxu0 0.0
  %364 = vmatpush1.xpose.msra.mxu0 %v286
  %365 = vmatprep.subr.mxu0 0.0
  %366 = vmatpush2.xpose.msra.mxu0 0.0
  %367 = vmatprep.subr.mxu0 0.0
  %368 = vmatpush2.xpose.msra.mxu0 0.0
  %369 = vmatprep.subr.mxu0 0.0
  %370 = vmatpush2.xpose.msra.mxu0 0.0
  %371 = vmatprep.subr.mxu0 0.0
  %372 = vmatpush2.xpose.msra.mxu0 0.0
  %373 = vmatprep.subr.mxu0 0.0
  %374 = vmatpush2.xpose.msra.mxu0 0.0
  %375 = vmatprep.subr.mxu0 0.0
  %376 = vmatpush2.xpose.msra.mxu0 0.0
  %377 = vmatprep.subr.mxu0 0.0
  %378 = vmatpush2.xpose.msra.mxu0 0.0
  %379 = vmatprep.subr.mxu0 0.0
  %380 = vmatpush2.xpose.msra.mxu0 0.0
  %381 = vmatprep.subr.mxu0 0.0
  %382 = vmatpush2.xpose.msra.mxu0 0.0
  %383 = vmatprep.subr.mxu0 0.0
  %384 = vmatpush2.xpose.msra.mxu0 0.0
  %385 = vmatprep.subr.mxu0 0.0
  %386 = vmatpush2.xpose.msra.mxu0 0.0
  %387 = vmatprep.subr.mxu0 0.0
  %388 = vmatpush2.xpose.msra.mxu0 0.0
  %389 = vmatprep.subr.mxu0 0.0
  %390 = vmatpush2.xpose.msra.mxu0 0.0
  %391 = vmatprep.subr.mxu0 0.0
  %392 = vmatpush2.xpose.msra.mxu0 0.0
  %393 = vmatprep.subr.mxu0 0.0
  %394 = vmatpush2.xpose.msra.mxu0 0.0
  %395 = vmatprep.subr.mxu0 0.0
  %396 = vmatpush2.xpose.msra.mxu0 0.0
  %397 = vmatprep.mubr.f32.mxu0 0.0
  %398 = vmatmul.mubr.f32.gmra.mxu0 %v283
  %v399 = vpop.f32.mrf.mxu0
  %v400 = vadd.f32 %v280, %v399
  %v401 = vpop.f32.mrf.mxu0
  %402 = vdwg.mxu0
  %403 = vst [vmem:[%s5] sm:$0x1] %v400
  %v404 = vld [vmem:[%s3] sm:$0xff]
  %v405 = vld [vmem:[%s3 + $0x8] sm:$0xff]
  %v406 = vld [vmem:[%s3 + $0x10] sm:$0xff]
  %v407 = vld [vmem:[%s3 + $0x18] sm:$0xff]
  %v408 = vld [vmem:[%s3 + $0x20] sm:$0xff]
  %v409 = vld [vmem:[%s3 + $0x28] sm:$0xff]
  %v410 = vld [vmem:[%s3 + $0x30] sm:$0xff]
  %v411 = vld [vmem:[%s3 + $0x38] sm:$0xff]
  %v412 = vld [vmem:[%s3 + $0x40] sm:$0xff]
  %v413 = vld [vmem:[%s3 + $0x48] sm:$0xff]
  %v414 = vld [vmem:[%s3 + $0x50] sm:$0xff]
  %v415 = vld [vmem:[%s3 + $0x58] sm:$0xff]
  %v416 = vld [vmem:[%s3 + $0x60] sm:$0xff]
  %v417 = vld [vmem:[%s3 + $0x68] sm:$0xff]
  %v418 = vld [vmem:[%s3 + $0x70] sm:$0xff]
  %v419 = vld [vmem:[%s3 + $0x78] sm:$0xff]
  %v420 = vmul.f32 %v404, %v169
  %v421 = vmul.f32 %v405, %v174
  %v422 = vmul.f32 %v406, %v179
  %v423 = vmul.f32 %v407, %v184
  %v424 = vmul.f32 %v408, %v189
  %v425 = vmul.f32 %v409, %v194
  %v426 = vmul.f32 %v410, %v199
  %v427 = vmul.f32 %v411, %v204
  %v428 = vmul.f32 %v412, %v209
  %v429 = vmul.f32 %v413, %v214
  %v430 = vmul.f32 %v414, %v219
  %v431 = vmul.f32 %v415, %v224
  %v432 = vmul.f32 %v416, %v229
  %v433 = vmul.f32 %v417, %v234
  %v434 = vmul.f32 %v418, %v239
  %v435 = vmul.f32 %v419, %v244
  %v437 = vsel %vm281, %v420, 0
  %v440 = vsel %vm281, %v421, 0
  %v443 = vsel %vm281, %v422, 0
  %v446 = vsel %vm281, %v423, 0
  %v449 = vsel %vm281, %v424, 0
  %v452 = vsel %vm281, %v425, 0
  %v455 = vsel %vm281, %v426, 0
  %v458 = vsel %vm281, %v427, 0
  %v461 = vsel %vm281, %v428, 0
  %v464 = vsel %vm281, %v429, 0
  %v467 = vsel %vm281, %v430, 0
  %v470 = vsel %vm281, %v431, 0
  %v473 = vsel %vm281, %v432, 0
  %v476 = vsel %vm281, %v433, 0
  %v479 = vsel %vm281, %v434, 0
  %v482 = vsel %vm281, %v435, 0
  %484 = vmatprep.subr.mxu0 0.0
  %485 = vmatpush1.xpose.msra.mxu0 %v482
  %486 = vmatprep.subr.mxu0 0.0
  %487 = vmatpush1.xpose.msra.mxu0 %v479
  %488 = vmatprep.subr.mxu0 0.0
  %489 = vmatpush1.xpose.msra.mxu0 %v476
  %490 = vmatprep.subr.mxu0 0.0
  %491 = vmatpush1.xpose.msra.mxu0 %v473
  %492 = vmatprep.subr.mxu0 0.0
  %493 = vmatpush1.xpose.msra.mxu0 %v470
  %494 = vmatprep.subr.mxu0 0.0
  %495 = vmatpush1.xpose.msra.mxu0 %v467
  %496 = vmatprep.subr.mxu0 0.0
  %497 = vmatpush1.xpose.msra.mxu0 %v464
  %498 = vmatprep.subr.mxu0 0.0
  %499 = vmatpush1.xpose.msra.mxu0 %v461
  %500 = vmatprep.subr.mxu0 0.0
  %501 = vmatpush1.xpose.msra.mxu0 %v458
  %502 = vmatprep.subr.mxu0 0.0
  %503 = vmatpush1.xpose.msra.mxu0 %v455
  %504 = vmatprep.subr.mxu0 0.0
  %505 = vmatpush1.xpose.msra.mxu0 %v452
  %506 = vmatprep.subr.mxu0 0.0
  %507 = vmatpush1.xpose.msra.mxu0 %v449
  %508 = vmatprep.subr.mxu0 0.0
  %509 = vmatpush1.xpose.msra.mxu0 %v446
  %510 = vmatprep.subr.mxu0 0.0
  %511 = vmatpush1.xpose.msra.mxu0 %v443
  %512 = vmatprep.subr.mxu0 0.0
  %513 = vmatpush1.xpose.msra.mxu0 %v440
  %514 = vmatprep.subr.mxu0 0.0
  %515 = vmatpush1.xpose.msra.mxu0 %v437
  %516 = vmatprep.subr.mxu0 0.0
  %517 = vmatpush2.xpose.msra.mxu0 0.0
  %518 = vmatprep.subr.mxu0 0.0
  %519 = vmatpush2.xpose.msra.mxu0 0.0
  %520 = vmatprep.subr.mxu0 0.0
  %521 = vmatpush2.xpose.msra.mxu0 0.0
  %522 = vmatprep.subr.mxu0 0.0
  %523 = vmatpush2.xpose.msra.mxu0 0.0
  %524 = vmatprep.subr.mxu0 0.0
  %525 = vmatpush2.xpose.msra.mxu0 0.0
  %526 = vmatprep.subr.mxu0 0.0
  %527 = vmatpush2.xpose.msra.mxu0 0.0
  %528 = vmatprep.subr.mxu0 0.0
  %529 = vmatpush2.xpose.msra.mxu0 0.0
  %530 = vmatprep.subr.mxu0 0.0
  %531 = vmatpush2.xpose.msra.mxu0 0.0
  %532 = vmatprep.subr.mxu0 0.0
  %533 = vmatpush2.xpose.msra.mxu0 0.0
  %534 = vmatprep.subr.mxu0 0.0
  %535 = vmatpush2.xpose.msra.mxu0 0.0
  %536 = vmatprep.subr.mxu0 0.0
  %537 = vmatpush2.xpose.msra.mxu0 0.0
  %538 = vmatprep.subr.mxu0 0.0
  %539 = vmatpush2.xpose.msra.mxu0 0.0
  %540 = vmatprep.subr.mxu0 0.0
  %541 = vmatpush2.xpose.msra.mxu0 0.0
  %542 = vmatprep.subr.mxu0 0.0
  %543 = vmatpush2.xpose.msra.mxu0 0.0
  %544 = vmatprep.subr.mxu0 0.0
  %545 = vmatpush2.xpose.msra.mxu0 0.0
  %546 = vmatprep.subr.mxu0 0.0
  %547 = vmatpush2.xpose.msra.mxu0 0.0
  %548 = vmatprep.mubr.f32.mxu0 0.0
  %549 = vmatmul.mubr.f32.gmra.mxu0 %v283
  %v550 = vpop.f32.mrf.mxu0
  %v551 = vadd.f32 %v280, %v550
  %v552 = vpop.f32.mrf.mxu0
  %553 = vdwg.mxu0
  %554 = vst [vmem:[%s6] sm:$0x1] %v551
  // Predicated region
  $region18: #{discriminator2_forward.1} parent=0 // pred_check
    _
  $region19: #{discriminator2_forward.1} parent=0 // pred_check_branch
    %556 = sbr.rel (0) target = $region21
  $region20: #{discriminator2_forward.1} parent=0 // pred_region
    _
  $region21: #{discriminator2_forward.1} parent=0 // pred_fallthru
    _
  // Predicated region
  $region22: #{discriminator2_forward.1} parent=0 // pred_check
    _
  $region23: #{discriminator2_forward.1} parent=0 // pred_check_branch
    %558 = sbr.rel (0) target = $region25
  $region24: #{discriminator2_forward.1} parent=0 // pred_region
    _
  $region25: #{discriminator2_forward.1} parent=0 // pred_fallthru
    _
  // Predicated region
  $region26: #{discriminator2_forward.1} parent=0 // pred_check
    _
  $region27: #{discriminator2_forward.1} parent=0 // pred_check_branch
    %560 = sbr.rel (0) target = $region29
  $region28: #{discriminator2_forward.1} parent=0 // pred_region
    _
  $region29: #{discriminator2_forward.1} parent=0 // pred_fallthru
    _
  // Predicated region
  $region30: #{discriminator2_forward.1} parent=0 // pred_check
    _
  $region31: #{discriminator2_forward.1} parent=0 // pred_check_branch
    %562 = sbr.rel (0) target = $region33
  $region32: #{discriminator2_forward.1} parent=0 // pred_region
    _
  $region33: #{discriminator2_forward.1} parent=0 // pred_fallthru
    _

</llo_original>
